<compile_context>
chip_gen: v7x
topology: tpu7x:2x2x1
jax: 0.10.0
libtpu: 0.0.40
codegen_flags: <defaults>
</compile_context>

<pallas_src>
import functools
import math

import jax
import jax.numpy as jnp
from jax.experimental import pallas as pl
from jax.experimental.pallas import tpu as pltpu


def _round_up(x, m):
    return ((x + m - 1) // m) * m


def mlp1_kernel(x_ref, w1_ref, b1_ref, w2_ref, b2_ref, w3_ref, b3_ref, o_ref):
    """Fused 3-layer MLP: three MXU matmuls (bf16 operands, f32 accumulation) + VPU bias/ReLU."""
    x = x_ref[...]
    h1 = jnp.dot(x, w1_ref[...], preferred_element_type=jnp.float32) + b1_ref[...]
    h1 = jnp.maximum(h1, 0.0).astype(w2_ref.dtype)
    h2 = jnp.dot(h1, w2_ref[...], preferred_element_type=jnp.float32) + b2_ref[...]
    h2 = jnp.maximum(h2, 0.0).astype(w3_ref.dtype)
    o_ref[...] = (
        jnp.dot(h2, w3_ref[...], preferred_element_type=jnp.float32) + b3_ref[...]
    ).astype(o_ref.dtype)


def _pick_tile_b(batch):
    # Tiny batches: one grid step (per-step overhead would dominate otherwise).
    if batch <= 256:
        return batch
    # Large batches: MXU-friendly multiple of 128 with >= 2 grid steps so the
    # "parallel" batch axis can be sharded across both v7x TensorCores.
    for t in (512, 256, 128):
        if batch >= 2 * t:
            return t
    return 128


@functools.partial(jax.jit, static_argnames=("tile_b", "compute_dtype"))
def mlp1_forward(x, w1, b1, w2, b2, w3, b3, *, tile_b=None, compute_dtype=jnp.bfloat16):
    # Flatten NCHW -> (N, C*H*W), matching torch's x.view(x.size(0), -1).
    batch = x.shape[0]
    x2d = x.reshape(batch, -1)
    in_features = x2d.shape[1]
    h_a = w1.shape[1]          # hidden_size * 8
    h_b = w2.shape[1]          # hidden_size * 2
    out_features = w3.shape[1]

    if tile_b is None:
        tile_b = _pick_tile_b(batch)

    # Lane-dense output: pad out_features up to a multiple of 128 (zero columns)
    # so the final store is an unmasked full-vreg vst; slice back afterwards.
    out_p = _round_up(max(out_features, 1), 128)
    if out_p != out_features:
        w3p = jnp.pad(w3, ((0, 0), (0, out_p - out_features)))
        b3p = jnp.pad(b3, ((0, 0), (0, out_p - out_features)))
    else:
        w3p, b3p = w3, b3

    # bf16 operands (f32 accumulation happens in the kernel); biases stay f32.
    x_c = x2d.astype(compute_dtype)
    w1_c = w1.astype(compute_dtype)
    w2_c = w2.astype(compute_dtype)
    w3_c = w3p.astype(compute_dtype)

    grid = (pl.cdiv(batch, tile_b),)

    out = pl.pallas_call(
        mlp1_kernel,
        out_shape=jax.ShapeDtypeStruct((batch, out_p), jnp.float32),
        grid_spec=pltpu.PrefetchScalarGridSpec(
            num_scalar_prefetch=0,
            grid=grid,
            in_specs=[
                # Batch-tiled activation; weights/biases fully resident every step
                # (constant index_map -> no re-DMA across grid steps).
                pl.BlockSpec((tile_b, in_features), lambda i: (i, 0)),
                pl.BlockSpec((in_features, h_a), lambda i: (0, 0)),
                pl.BlockSpec((1, h_a), lambda i: (0, 0)),
                pl.BlockSpec((h_a, h_b), lambda i: (0, 0)),
                pl.BlockSpec((1, h_b), lambda i: (0, 0)),
                pl.BlockSpec((h_b, out_p), lambda i: (0, 0)),
                pl.BlockSpec((1, out_p), lambda i: (0, 0)),
            ],
            out_specs=pl.BlockSpec((tile_b, out_p), lambda i: (i, 0)),
        ),
        compiler_params=pltpu.CompilerParams(
            dimension_semantics=("parallel",),
            vmem_limit_bytes=32 * 1024 * 1024,
        ),
    )(x_c, w1_c, b1, w2_c, b2, w3_c, b3p)

    return out[:, :out_features]


def init_linear(key, fan_in, fan_out):
    """Deterministic init mirroring nn.Linear's U(-1/sqrt(fan_in), 1/sqrt(fan_in))."""
    kw, kb = jax.random.split(key)
    bound = 1.0 / math.sqrt(fan_in)
    # Stored as (in, out) = transpose of PyTorch's (out, in).
    w = jax.random.uniform(kw, (fan_in, fan_out), jnp.float32, -bound, bound)
    b = jax.random.uniform(kb, (1, fan_out), jnp.float32, -bound, bound)
    return w, b


if __name__ == "__main__":
    # Shapes consistent with the module:
    #   x: NCHW = (batch, 4, 8, 4) -> input_size = 128
    #   hidden_size = 32           -> hidden*8 = 256, hidden*2 = 64
    #   output_size = 16
    C, H, W = 4, 8, 4
    input_size = C * H * W
    hidden_size = 32
    output_size = 16

    key = jax.random.PRNGKey(0)
    kx, k1, k2, k3 = jax.random.split(key, 4)

    w1, b1 = init_linear(k1, input_size, hidden_size * 8)
    w2, b2 = init_linear(k2, hidden_size * 8, hidden_size * 2)
    w3, b3 = init_linear(k3, hidden_size * 2, output_size)

    def reference(xin):
        # Pure-JAX reference with the same bf16-operand / f32-accumulate recipe.
        r = xin.reshape(xin.shape[0], -1).astype(jnp.bfloat16)
        r = jnp.dot(r, w1.astype(jnp.bfloat16), preferred_element_type=jnp.float32) + b1
        r = jnp.maximum(r, 0.0).astype(jnp.bfloat16)
        r = jnp.dot(r, w2.astype(jnp.bfloat16), preferred_element_type=jnp.float32) + b2
        r = jnp.maximum(r, 0.0).astype(jnp.bfloat16)
        return jnp.dot(r, w3.astype(jnp.bfloat16), preferred_element_type=jnp.float32) + b3

    # Two cases: tiny single-tile batch, and a larger batch exercising the
    # multi-step parallel grid with a partial (masked) last batch tile.
    for batch in (8, 320):
        xb = jax.random.normal(jax.random.fold_in(kx, batch), (batch, C, H, W), jnp.float32)
        out = jax.block_until_ready(mlp1_forward(xb, w1, b1, w2, b2, w3, b3))
        ref = reference(xb)
        assert out.shape == (batch, output_size)
        assert jnp.allclose(out, ref, atol=1e-2, rtol=1e-2), f"mismatch vs reference (batch={batch})"

    print("KERNEL_OK")
</pallas_src>

<mosaic_0001>
module attributes {stable_mosaic.version = 11 : i64} {
  func.func @mlp1_kernel(%arg0: i32, %arg1: memref<8x128xbf16, #tpu.memory_space<vmem>>, %arg2: memref<128x256xbf16, #tpu.memory_space<vmem>>, %arg3: memref<1x256xf32, #tpu.memory_space<vmem>>, %arg4: memref<256x64xbf16, #tpu.memory_space<vmem>>, %arg5: memref<1x64xf32, #tpu.memory_space<vmem>>, %arg6: memref<64x128xbf16, #tpu.memory_space<vmem>>, %arg7: memref<1x128xf32, #tpu.memory_space<vmem>>, %arg8: memref<8x128xf32, #tpu.memory_space<vmem>>) attributes {dimension_semantics = [#tpu.dimension_semantics<parallel>], iteration_bounds = array<i64: 1>, scalar_prefetch = 0 : i64, scratch_operands = 0 : i64, tpu.core_type = #tpu.core_type<tc>, window_params = [{transform_indices = @transform_0, window_bounds = array<i64: 8, 128>}, {pipeline_mode = #tpu.pipeline_mode<synchronous>, transform_indices = @transform_1, window_bounds = array<i64: 128, 256>}, {pipeline_mode = #tpu.pipeline_mode<synchronous>, transform_indices = @transform_2, window_bounds = array<i64: 1, 256>}, {pipeline_mode = #tpu.pipeline_mode<synchronous>, transform_indices = @transform_3, window_bounds = array<i64: 256, 64>}, {pipeline_mode = #tpu.pipeline_mode<synchronous>, transform_indices = @transform_4, window_bounds = array<i64: 1, 64>}, {pipeline_mode = #tpu.pipeline_mode<synchronous>, transform_indices = @transform_5, window_bounds = array<i64: 64, 128>}, {pipeline_mode = #tpu.pipeline_mode<synchronous>, transform_indices = @transform_6, window_bounds = array<i64: 1, 128>}, {transform_indices = @transform_7, window_bounds = array<i64: 8, 128>}]} {
    %c0 = arith.constant 0 : index
    %c0_0 = arith.constant 0 : index
    %0 = vector.load %arg1[%c0, %c0_0] : memref<8x128xbf16, #tpu.memory_space<vmem>>, vector<8x128xbf16>
    %c0_1 = arith.constant 0 : index
    %c0_2 = arith.constant 0 : index
    %1 = vector.load %arg2[%c0_1, %c0_2] : memref<128x256xbf16, #tpu.memory_space<vmem>>, vector<128x256xbf16>
    %cst = arith.constant dense<0.000000e+00> : vector<8x256xf32>
    %2 = tpu.matmul %0, %1, %cst {dimension_numbers = #tpu.dot_dimension_numbers<[1], [0], [0], [1], [0, 0, 1, 1], [], []>} : vector<8x128xbf16>, vector<128x256xbf16>, vector<8x256xf32> -> vector<8x256xf32>
    %c0_3 = arith.constant 0 : index
    %c0_4 = arith.constant 0 : index
    %3 = vector.load %arg3[%c0_3, %c0_4] : memref<1x256xf32, #tpu.memory_space<vmem>>, vector<1x256xf32>
    %4 = vector.broadcast %3 : vector<1x256xf32> to vector<8x256xf32>
    %5 = arith.addf %2, %4 : vector<8x256xf32>
    %cst_5 = arith.constant 0.000000e+00 : f32
    %6 = vector.broadcast %cst_5 : f32 to vector<8x256xf32>
    %7 = arith.maximumf %5, %6 : vector<8x256xf32>
    %8 = arith.truncf %7 : vector<8x256xf32> to vector<8x256xbf16>
    %c0_6 = arith.constant 0 : index
    %c0_7 = arith.constant 0 : index
    %9 = vector.load %arg4[%c0_6, %c0_7] : memref<256x64xbf16, #tpu.memory_space<vmem>>, vector<256x64xbf16>
    %cst_8 = arith.constant dense<0.000000e+00> : vector<8x64xf32>
    %10 = tpu.matmul %8, %9, %cst_8 {dimension_numbers = #tpu.dot_dimension_numbers<[1], [0], [0], [1], [0, 0, 1, 1], [], []>} : vector<8x256xbf16>, vector<256x64xbf16>, vector<8x64xf32> -> vector<8x64xf32>
    %c0_9 = arith.constant 0 : index
    %c0_10 = arith.constant 0 : index
    %11 = vector.load %arg5[%c0_9, %c0_10] : memref<1x64xf32, #tpu.memory_space<vmem>>, vector<1x64xf32>
    %12 = vector.broadcast %11 : vector<1x64xf32> to vector<8x64xf32>
    %13 = arith.addf %10, %12 : vector<8x64xf32>
    %cst_11 = arith.constant 0.000000e+00 : f32
    %14 = vector.broadcast %cst_11 : f32 to vector<8x64xf32>
    %15 = arith.maximumf %13, %14 : vector<8x64xf32>
    %16 = arith.truncf %15 : vector<8x64xf32> to vector<8x64xbf16>
    %c0_12 = arith.constant 0 : index
    %c0_13 = arith.constant 0 : index
    %17 = vector.load %arg6[%c0_12, %c0_13] : memref<64x128xbf16, #tpu.memory_space<vmem>>, vector<64x128xbf16>
    %cst_14 = arith.constant dense<0.000000e+00> : vector<8x128xf32>
    %18 = tpu.matmul %16, %17, %cst_14 {dimension_numbers = #tpu.dot_dimension_numbers<[1], [0], [0], [1], [0, 0, 1, 1], [], []>} : vector<8x64xbf16>, vector<64x128xbf16>, vector<8x128xf32> -> vector<8x128xf32>
    %c0_15 = arith.constant 0 : index
    %c0_16 = arith.constant 0 : index
    %19 = vector.load %arg7[%c0_15, %c0_16] : memref<1x128xf32, #tpu.memory_space<vmem>>, vector<1x128xf32>
    %20 = vector.broadcast %19 : vector<1x128xf32> to vector<8x128xf32>
    %21 = arith.addf %18, %20 : vector<8x128xf32>
    %c0_17 = arith.constant 0 : index
    %c0_18 = arith.constant 0 : index
    %22 = vector.load %arg8[%c0_17, %c0_18] : memref<8x128xf32, #tpu.memory_space<vmem>>, vector<8x128xf32>
    tpu.vector_store %arg8[%c0_17, %c0_18], %21 {strides = array<i32>} : memref<8x128xf32, #tpu.memory_space<vmem>>, vector<8x128xf32>,
    return
  }
  func.func @transform_0(%arg0: i32) -> (i32, i32) {
    %c0_i32 = arith.constant 0 : i32
    %c0_i32_0 = arith.constant 0 : i32
    return %arg0, %c0_i32 : i32, i32
  }
  func.func @transform_1(%arg0: i32) -> (i32, i32) {
    %c0_i32 = arith.constant 0 : i32
    %c0_i32_0 = arith.constant 0 : i32
    %c0_i32_1 = arith.constant 0 : i32
    return %c0_i32, %c0_i32_0 : i32, i32
  }
  func.func @transform_2(%arg0: i32) -> (i32, i32) {
    %c0_i32 = arith.constant 0 : i32
    %c0_i32_0 = arith.constant 0 : i32
    %c0_i32_1 = arith.constant 0 : i32
    return %c0_i32, %c0_i32_0 : i32, i32
  }
  func.func @transform_3(%arg0: i32) -> (i32, i32) {
    %c0_i32 = arith.constant 0 : i32
    %c0_i32_0 = arith.constant 0 : i32
    %c0_i32_1 = arith.constant 0 : i32
    return %c0_i32, %c0_i32_0 : i32, i32
  }
  func.func @transform_4(%arg0: i32) -> (i32, i32) {
    %c0_i32 = arith.constant 0 : i32
    %c0_i32_0 = arith.constant 0 : i32
    %c0_i32_1 = arith.constant 0 : i32
    return %c0_i32, %c0_i32_0 : i32, i32
  }
  func.func @transform_5(%arg0: i32) -> (i32, i32) {
    %c0_i32 = arith.constant 0 : i32
    %c0_i32_0 = arith.constant 0 : i32
    %c0_i32_1 = arith.constant 0 : i32
    return %c0_i32, %c0_i32_0 : i32, i32
  }
  func.func @transform_6(%arg0: i32) -> (i32, i32) {
    %c0_i32 = arith.constant 0 : i32
    %c0_i32_0 = arith.constant 0 : i32
    %c0_i32_1 = arith.constant 0 : i32
    return %c0_i32, %c0_i32_0 : i32, i32
  }
  func.func @transform_7(%arg0: i32) -> (i32, i32) {
    %c0_i32 = arith.constant 0 : i32
    %c0_i32_0 = arith.constant 0 : i32
    return %arg0, %c0_i32 : i32, i32
  }
}

</mosaic_0001>

<llo_original>
// kernel: mlp1_forward.1
$region0: #{mlp1_forward.1}
  #allocation0 [shape = 'u32[]', space=smem, size = 0x4, offset = 0x4, fixed_abs, tag = 'smem constant byte address 0x4 - core index']
  #allocation1 [shape = 'u32[144,128]{1,0:T(1,128)}', space=vmem, size = 0x12000, scoped, tag = 'internal scratch']
  %s0 = inlined_call_operand.vmem [shape: bf16[8,128], index: 0, kind: input, shape index: {}]
  %s1 = inlined_call_operand.vmem [shape: bf16[128,256], index: 1, kind: input, shape index: {}]
  %s2 = inlined_call_operand.vmem [shape: f32[1,256], index: 2, kind: input, shape index: {}]
  %s3 = inlined_call_operand.vmem [shape: bf16[256,64], index: 3, kind: input, shape index: {}]
  %s4 = inlined_call_operand.vmem [shape: f32[1,64], index: 4, kind: input, shape index: {}]
  %s5 = inlined_call_operand.vmem [shape: bf16[64,128], index: 5, kind: input, shape index: {}]
  %s6 = inlined_call_operand.vmem [shape: f32[1,128], index: 6, kind: input, shape index: {}]
  %s7 = inlined_call_operand.hbm [shape: f32[8,128], index: 7, kind: output, shape index: {}]
  %s8 = sld [smem:[#allocation0]]
  $region38: #{mlp1_forward.1} parent=0
    _
  %s10 = ssub.s32 1, %s8
  %s11 = scalar_select 0, %s10, %s8
  $region1: #{mlp1_forward.1} parent=0
    #allocation2 [shape = 'u8[4096]{0}', space=vmem, size = 0x1000, scoped, tag = 'output window, operand 0, single buffered']
    #allocation3 [shape = 's32[1]{0}', space=sflag, size = 0x4, scoped, tag = 'scoped memory for mlp1_forward.1']
    %12 = vsyncpa [#allocation3], 0
    // Predicated region
    $region2: #{mlp1_forward.1} parent=1 // pred_check
      _
    $region3: #{mlp1_forward.1} parent=1 // pred_check_branch
      %14 = sbr.rel (0) target = $region5
    $region4: #{mlp1_forward.1} parent=1 // pred_region
      _
    $region5: #{mlp1_forward.1} parent=1 // pred_fallthru
      _
    // Predicated region
    $region6: #{mlp1_forward.1} parent=1 // pred_check
      _
    $region7: #{mlp1_forward.1} parent=1 // pred_check_branch
      %16 = sbr.rel (0) target = $region9
    $region8: #{mlp1_forward.1} parent=1 // pred_region
      _
    $region9: #{mlp1_forward.1} parent=1 // pred_fallthru
      _
    // Predicated region
    $region10: #{mlp1_forward.1} parent=1 // pred_check
      _
    $region11: #{mlp1_forward.1} parent=1 // pred_check_branch
      %18 = sbr.rel (0) target = $region13
    $region12: #{mlp1_forward.1} parent=1 // pred_region
      _
    $region13: #{mlp1_forward.1} parent=1 // pred_fallthru
      _
    // Predicated region
    $region14: #{mlp1_forward.1} parent=1 // pred_check
      _
    $region15: #{mlp1_forward.1} parent=1 // pred_check_branch
      %20 = sbr.rel (0) target = $region17
    $region16: #{mlp1_forward.1} parent=1 // pred_region
      _
    $region17: #{mlp1_forward.1} parent=1 // pred_fallthru
      _
    // Predicated region
    $region18: #{mlp1_forward.1} parent=1 // pred_check
      _
    $region19: #{mlp1_forward.1} parent=1 // pred_check_branch
      %22 = sbr.rel (0) target = $region21
    $region20: #{mlp1_forward.1} parent=1 // pred_region
      _
    $region21: #{mlp1_forward.1} parent=1 // pred_fallthru
      _
    // Predicated region
    $region22: #{mlp1_forward.1} parent=1 // pred_check
      _
    $region23: #{mlp1_forward.1} parent=1 // pred_check_branch
      %24 = sbr.rel (0) target = $region25
    $region24: #{mlp1_forward.1} parent=1 // pred_region
      _
    $region25: #{mlp1_forward.1} parent=1 // pred_fallthru
      _
    // Predicated region
    $region26: #{mlp1_forward.1} parent=1 // pred_check
      _
    $region27: #{mlp1_forward.1} parent=1 // pred_check_branch
      %26 = sbr.rel (0) target = $region29
    $region28: #{mlp1_forward.1} parent=1 // pred_region
      _
    $region29: #{mlp1_forward.1} parent=1 // pred_fallthru
      _
    %v28 = vld [vmem:[%s0] sm:$0xf]
    %v29 = vld [vmem:[%s1] sm:$0xff]
    %v30 = vld [vmem:[%s1 + $0x8] sm:$0xff]
    %v31 = vld [vmem:[%s1 + $0x10] sm:$0xff]
    %v32 = vld [vmem:[%s1 + $0x18] sm:$0xff]
    %v33 = vld [vmem:[%s1 + $0x20] sm:$0xff]
    %v34 = vld [vmem:[%s1 + $0x28] sm:$0xff]
    %v35 = vld [vmem:[%s1 + $0x30] sm:$0xff]
    %v36 = vld [vmem:[%s1 + $0x38] sm:$0xff]
    %v37 = vld [vmem:[%s1 + $0x40] sm:$0xff]
    %v38 = vld [vmem:[%s1 + $0x48] sm:$0xff]
    %v39 = vld [vmem:[%s1 + $0x50] sm:$0xff]
    %v40 = vld [vmem:[%s1 + $0x58] sm:$0xff]
    %v41 = vld [vmem:[%s1 + $0x60] sm:$0xff]
    %v42 = vld [vmem:[%s1 + $0x68] sm:$0xff]
    %v43 = vld [vmem:[%s1 + $0x70] sm:$0xff]
    %v44 = vld [vmem:[%s1 + $0x78] sm:$0xff]
    %v45 = vld [vmem:[%s2] sm:$0x3]
    %v47 = vlaneseq
    %v48 = vshrl.u32 %v47, 7
    %v49 = vsub.s32 0, %v48
    %v50 = vrot.slane %v45, %v49
    %v51 = vlaneseq
    %v52 = vshrl.u32 %v51, 7
    %v53 = vsub.s32 1, %v52
    %v54 = vrot.slane %v45, %v53
    %v73 = vunpack.c.l.b16 %v29
    %v74 = vunpack.c.h.b16 %v29
    %v75 = vunpack.c.l.b16 %v30
    %v76 = vunpack.c.h.b16 %v30
    %v77 = vunpack.c.l.b16 %v31
    %v78 = vunpack.c.h.b16 %v31
    %v79 = vunpack.c.l.b16 %v32
    %v80 = vunpack.c.h.b16 %v32
    %v81 = vunpack.c.l.b16 %v33
    %v82 = vunpack.c.h.b16 %v33
    %v83 = vunpack.c.l.b16 %v34
    %v84 = vunpack.c.h.b16 %v34
    %v85 = vunpack.c.l.b16 %v35
    %v86 = vunpack.c.h.b16 %v35
    %v87 = vunpack.c.l.b16 %v36
    %v88 = vunpack.c.h.b16 %v36
    %v89 = vunpack.c.l.b16 %v37
    %v90 = vunpack.c.h.b16 %v37
    %v91 = vunpack.c.l.b16 %v38
    %v92 = vunpack.c.h.b16 %v38
    %v93 = vunpack.c.l.b16 %v39
    %v94 = vunpack.c.h.b16 %v39
    %v95 = vunpack.c.l.b16 %v40
    %v96 = vunpack.c.h.b16 %v40
    %v97 = vunpack.c.l.b16 %v41
    %v98 = vunpack.c.h.b16 %v41
    %v99 = vunpack.c.l.b16 %v42
    %v100 = vunpack.c.h.b16 %v42
    %v101 = vunpack.c.l.b16 %v43
    %v102 = vunpack.c.h.b16 %v43
    %v103 = vunpack.c.l.b16 %v44
    %v104 = vunpack.c.h.b16 %v44
    %v105 = vpack.c.b16 %v75, %v73
    %v106 = vpack.c.b16 %v76, %v74
    %v107 = vpack.c.b16 %v79, %v77
    %v108 = vpack.c.b16 %v80, %v78
    %v109 = vpack.c.b16 %v83, %v81
    %v110 = vpack.c.b16 %v84, %v82
    %v111 = vpack.c.b16 %v87, %v85
    %v112 = vpack.c.b16 %v88, %v86
    %v113 = vpack.c.b16 %v91, %v89
    %v114 = vpack.c.b16 %v92, %v90
    %v115 = vpack.c.b16 %v95, %v93
    %v116 = vpack.c.b16 %v96, %v94
    %v117 = vpack.c.b16 %v99, %v97
    %v118 = vpack.c.b16 %v100, %v98
    %v119 = vpack.c.b16 %v103, %v101
    %v120 = vpack.c.b16 %v104, %v102
    %137 = vmatprep.subr.bf16.mxu0 %v106
    %138 = vmatpush1.bf16.msra.mxu0 %v105
    %139 = vmatprep.subr.bf16.mxu0 %v108
    %140 = vmatpush1.bf16.msra.mxu0 %v107
    %141 = vmatprep.subr.bf16.mxu0 %v110
    %142 = vmatpush1.bf16.msra.mxu0 %v109
    %143 = vmatprep.subr.bf16.mxu0 %v112
    %144 = vmatpush1.bf16.msra.mxu0 %v111
    %145 = vmatprep.subr.bf16.mxu0 %v114
    %146 = vmatpush1.bf16.msra.mxu0 %v113
    %147 = vmatprep.subr.bf16.mxu0 %v116
    %148 = vmatpush1.bf16.msra.mxu0 %v115
    %149 = vmatprep.subr.bf16.mxu0 %v118
    %150 = vmatpush1.bf16.msra.mxu0 %v117
    %151 = vmatprep.subr.bf16.mxu0 %v120
    %152 = vmatpush1.bf16.msra.mxu0 %v119
    %153 = vmatprep.subr.bf16.mxu0 0
    %154 = vmatpush1.bf16.msra.mxu0 0
    %155 = vmatprep.subr.bf16.mxu0 0
    %156 = vmatpush1.bf16.msra.mxu0 0
    %157 = vmatprep.subr.bf16.mxu0 0
    %158 = vmatpush1.bf16.msra.mxu0 0
    %159 = vmatprep.subr.bf16.mxu0 0
    %160 = vmatpush1.bf16.msra.mxu0 0
    %161 = vmatprep.subr.bf16.mxu0 0
    %162 = vmatpush1.bf16.msra.mxu0 0
    %163 = vmatprep.subr.bf16.mxu0 0
    %164 = vmatpush1.bf16.msra.mxu0 0
    %165 = vmatprep.subr.bf16.mxu0 0
    %166 = vmatpush1.bf16.msra.mxu0 0
    %167 = vmatprep.subr.bf16.mxu0 0
    %168 = vmatpush1.bf16.msra.mxu0 0
    %169 = vmatprep.mubr.bf16.mxu0 0
    %170 = vmatmul.mubr.bf16.gmra.mrb[0].mxu0 %v28
    %v171 = vpop.f32.mrb[0].mxu0
    %v172 = vadd.f32 %v50, %v171
    %v173 = vpop.f32.mrb[0].mxu0
    %v174 = vadd.f32 %v54, %v173
    %v175 = vpop.f32.mrb[0].mxu0
    %v176 = vpop.f32.mrb[0].mxu0
    %177 = vdwg.mxu0
    %v178 = vmax.f32 %v172, 0.0
    %v179 = vmax.f32 %v174, 0.0
    %v180 = vpack.c.bf16 %v178, %v178
    %v181 = vpack.c.bf16 %v179, %v179
    %v182 = vld [vmem:[%s3] sm:$0xf]
    %v183 = vld [vmem:[%s3 + $0x4] sm:$0xf]
    %v184 = vld [vmem:[%s3 + $0x8] sm:$0xf]
    %v185 = vld [vmem:[%s3 + $0xc] sm:$0xf]
    %v186 = vld [vmem:[%s3 + $0x10] sm:$0xf]
    %v187 = vld [vmem:[%s3 + $0x14] sm:$0xf]
    %v188 = vld [vmem:[%s3 + $0x18] sm:$0xf]
    %v189 = vld [vmem:[%s3 + $0x1c] sm:$0xf]
    %v190 = vld [vmem:[%s3 + $0x20] sm:$0xf]
    %v191 = vld [vmem:[%s3 + $0x24] sm:$0xf]
    %v192 = vld [vmem:[%s3 + $0x28] sm:$0xf]
    %v193 = vld [vmem:[%s3 + $0x2c] sm:$0xf]
    %v194 = vld [vmem:[%s3 + $0x30] sm:$0xf]
    %v195 = vld [vmem:[%s3 + $0x34] sm:$0xf]
    %v196 = vld [vmem:[%s3 + $0x38] sm:$0xf]
    %v197 = vld [vmem:[%s3 + $0x3c] sm:$0xf]
    %v198 = vld [vmem:[%s3 + $0x40] sm:$0xf]
    %v199 = vld [vmem:[%s3 + $0x44] sm:$0xf]
    %v200 = vld [vmem:[%s3 + $0x48] sm:$0xf]
    %v201 = vld [vmem:[%s3 + $0x4c] sm:$0xf]
    %v202 = vld [vmem:[%s3 + $0x50] sm:$0xf]
    %v203 = vld [vmem:[%s3 + $0x54] sm:$0xf]
    %v204 = vld [vmem:[%s3 + $0x58] sm:$0xf]
    %v205 = vld [vmem:[%s3 + $0x5c] sm:$0xf]
    %v206 = vld [vmem:[%s3 + $0x60] sm:$0xf]
    %v207 = vld [vmem:[%s3 + $0x64] sm:$0xf]
    %v208 = vld [vmem:[%s3 + $0x68] sm:$0xf]
    %v209 = vld [vmem:[%s3 + $0x6c] sm:$0xf]
    %v210 = vld [vmem:[%s3 + $0x70] sm:$0xf]
    %v211 = vld [vmem:[%s3 + $0x74] sm:$0xf]
    %v212 = vld [vmem:[%s3 + $0x78] sm:$0xf]
    %v213 = vld [vmem:[%s3 + $0x7c] sm:$0xf]
    %v214 = vld [vmem:[%s4] sm:$0x1]
    %v216 = vlaneseq
    %v217 = vshrl.u32 %v216, 7
    %v218 = vsub.s32 0, %v217
    %v219 = vrot.slane %v214, %v218
    %v253 = vunpack.c.l.b16 %v182
    %v254 = vunpack.c.l.b16 %v183
    %v255 = vunpack.c.l.b16 %v184
    %v256 = vunpack.c.l.b16 %v185
    %v257 = vunpack.c.l.b16 %v186
    %v258 = vunpack.c.l.b16 %v187
    %v259 = vunpack.c.l.b16 %v188
    %v260 = vunpack.c.l.b16 %v189
    %v261 = vunpack.c.l.b16 %v190
    %v262 = vunpack.c.l.b16 %v191
    %v263 = vunpack.c.l.b16 %v192
    %v264 = vunpack.c.l.b16 %v193
    %v265 = vunpack.c.l.b16 %v194
    %v266 = vunpack.c.l.b16 %v195
    %v267 = vunpack.c.l.b16 %v196
    %v268 = vunpack.c.l.b16 %v197
    %v269 = vunpack.c.l.b16 %v198
    %v270 = vunpack.c.l.b16 %v199
    %v271 = vunpack.c.l.b16 %v200
    %v272 = vunpack.c.l.b16 %v201
    %v273 = vunpack.c.l.b16 %v202
    %v274 = vunpack.c.l.b16 %v203
    %v275 = vunpack.c.l.b16 %v204
    %v276 = vunpack.c.l.b16 %v205
    %v277 = vunpack.c.l.b16 %v206
    %v278 = vunpack.c.l.b16 %v207
    %v279 = vunpack.c.l.b16 %v208
    %v280 = vunpack.c.l.b16 %v209
    %v281 = vunpack.c.l.b16 %v210
    %v282 = vunpack.c.l.b16 %v211
    %v283 = vunpack.c.l.b16 %v212
    %v284 = vunpack.c.l.b16 %v213
    %v285 = vpack.c.b16 %v254, %v253
    %v286 = vpack.c.b16 %v256, %v255
    %v287 = vpack.c.b16 %v258, %v257
    %v288 = vpack.c.b16 %v260, %v259
    %v289 = vpack.c.b16 %v262, %v261
    %v290 = vpack.c.b16 %v264, %v263
    %v291 = vpack.c.b16 %v266, %v265
    %v292 = vpack.c.b16 %v268, %v267
    %v293 = vpack.c.b16 %v270, %v269
    %v294 = vpack.c.b16 %v272, %v271
    %v295 = vpack.c.b16 %v274, %v273
    %v296 = vpack.c.b16 %v276, %v275
    %v297 = vpack.c.b16 %v278, %v277
    %v298 = vpack.c.b16 %v280, %v279
    %v299 = vpack.c.b16 %v282, %v281
    %v300 = vpack.c.b16 %v284, %v283
    %317 = vmatprep.subr.bf16.mxu0 0
    %318 = vmatpush1.bf16.msra.mxu0 %v285
    %319 = vmatprep.subr.bf16.mxu0 0
    %320 = vmatpush1.bf16.msra.mxu0 %v286
    %321 = vmatprep.subr.bf16.mxu0 0
    %322 = vmatpush1.bf16.msra.mxu0 %v287
    %323 = vmatprep.subr.bf16.mxu0 0
    %324 = vmatpush1.bf16.msra.mxu0 %v288
    %325 = vmatprep.subr.bf16.mxu0 0
    %326 = vmatpush1.bf16.msra.mxu0 %v289
    %327 = vmatprep.subr.bf16.mxu0 0
    %328 = vmatpush1.bf16.msra.mxu0 %v290
    %329 = vmatprep.subr.bf16.mxu0 0
    %330 = vmatpush1.bf16.msra.mxu0 %v291
    %331 = vmatprep.subr.bf16.mxu0 0
    %332 = vmatpush1.bf16.msra.mxu0 %v292
    %333 = vmatprep.subr.bf16.mxu0 0
    %334 = vmatpush1.bf16.msra.mxu0 %v293
    %335 = vmatprep.subr.bf16.mxu0 0
    %336 = vmatpush1.bf16.msra.mxu0 %v294
    %337 = vmatprep.subr.bf16.mxu0 0
    %338 = vmatpush1.bf16.msra.mxu0 %v295
    %339 = vmatprep.subr.bf16.mxu0 0
    %340 = vmatpush1.bf16.msra.mxu0 %v296
    %341 = vmatprep.subr.bf16.mxu0 0
    %342 = vmatpush1.bf16.msra.mxu0 %v297
    %343 = vmatprep.subr.bf16.mxu0 0
    %344 = vmatpush1.bf16.msra.mxu0 %v298
    %345 = vmatprep.subr.bf16.mxu0 0
    %346 = vmatpush1.bf16.msra.mxu0 %v299
    %347 = vmatprep.subr.bf16.mxu0 0
    %348 = vmatpush1.bf16.msra.mxu0 %v300
    %349 = vmatprep.mubr.bf16.mxu0 %v181
    %350 = vmatmul.mubr.bf16.gmra.mrb[0].mxu0 %v180
    %v351 = vpop.f32.mrb[0].mxu0
    %v352 = vadd.f32 %v219, %v351
    %v353 = vpop.f32.mrb[0].mxu0
    %v354 = vpop.f32.mrb[0].mxu0
    %v355 = vpop.f32.mrb[0].mxu0
    %356 = vdwg.mxu0
    %v357 = vmax.f32 %v352, 0.0
    %v358 = vpack.c.bf16 %v357, %v357
    %v359 = vld [vmem:[%s5] sm:$0xf]
    %v360 = vld [vmem:[%s5 + $0x4] sm:$0xf]
    %v361 = vld [vmem:[%s5 + $0x8] sm:$0xf]
    %v362 = vld [vmem:[%s5 + $0xc] sm:$0xf]
    %v363 = vld [vmem:[%s5 + $0x10] sm:$0xf]
    %v364 = vld [vmem:[%s5 + $0x14] sm:$0xf]
    %v365 = vld [vmem:[%s5 + $0x18] sm:$0xf]
    %v366 = vld [vmem:[%s5 + $0x1c] sm:$0xf]
    %v367 = vld [vmem:[%s6] sm:$0x1]
    %v369 = vlaneseq
    %v370 = vshrl.u32 %v369, 7
    %v371 = vsub.s32 0, %v370
    %v372 = vrot.slane %v367, %v371
    %v382 = vunpack.c.l.b16 %v359
    %v383 = vunpack.c.l.b16 %v360
    %v384 = vunpack.c.l.b16 %v361
    %v385 = vunpack.c.l.b16 %v362
    %v386 = vunpack.c.l.b16 %v363
    %v387 = vunpack.c.l.b16 %v364
    %v388 = vunpack.c.l.b16 %v365
    %v389 = vunpack.c.l.b16 %v366
    %v390 = vpack.c.b16 %v383, %v382
    %v391 = vpack.c.b16 %v385, %v384
    %v392 = vpack.c.b16 %v387, %v386
    %v393 = vpack.c.b16 %v389, %v388
    %vm398 = vcmask 523264
    %v400 = vsel %vm398, %v358, 0
    %402 = vmatprep.subr.bf16.mxu0 0
    %403 = vmatpush1.bf16.msra.mxu0 %v390
    %404 = vmatprep.subr.bf16.mxu0 0
    %405 = vmatpush1.bf16.msra.mxu0 %v391
    %406 = vmatprep.subr.bf16.mxu0 0
    %407 = vmatpush1.bf16.msra.mxu0 %v392
    %408 = vmatprep.subr.bf16.mxu0 0
    %409 = vmatpush1.bf16.msra.mxu0 %v393
    %410 = vmatprep.subr.bf16.mxu0 0
    %411 = vmatpush1.bf16.msra.mxu0 0
    %412 = vmatprep.subr.bf16.mxu0 0
    %413 = vmatpush1.bf16.msra.mxu0 0
    %414 = vmatprep.subr.bf16.mxu0 0
    %415 = vmatpush1.bf16.msra.mxu0 0
    %416 = vmatprep.subr.bf16.mxu0 0
    %417 = vmatpush1.bf16.msra.mxu0 0
    %418 = vmatprep.subr.bf16.mxu0 0
    %419 = vmatpush1.bf16.msra.mxu0 0
    %420 = vmatprep.subr.bf16.mxu0 0
    %421 = vmatpush1.bf16.msra.mxu0 0
    %422 = vmatprep.subr.bf16.mxu0 0
    %423 = vmatpush1.bf16.msra.mxu0 0
    %424 = vmatprep.subr.bf16.mxu0 0
    %425 = vmatpush1.bf16.msra.mxu0 0
    %426 = vmatprep.subr.bf16.mxu0 0
    %427 = vmatpush1.bf16.msra.mxu0 0
    %428 = vmatprep.subr.bf16.mxu0 0
    %429 = vmatpush1.bf16.msra.mxu0 0
    %430 = vmatprep.subr.bf16.mxu0 0
    %431 = vmatpush1.bf16.msra.mxu0 0
    %432 = vmatprep.subr.bf16.mxu0 0
    %433 = vmatpush1.bf16.msra.mxu0 0
    %434 = vmatprep.mubr.bf16.mxu0 0
    %435 = vmatmul.mubr.bf16.gmra.mrb[0].mxu0 %v400
    %v436 = vpop.f32.mrb[0].mxu0
    %v437 = vadd.f32 %v372, %v436
    %v438 = vpop.f32.mrb[0].mxu0
    %v439 = vpop.f32.mrb[0].mxu0
    %v440 = vpop.f32.mrb[0].mxu0
    %441 = vdwg.mxu0
    %442 = vst [vmem:[#allocation2] sm:$0xff] %v437
    // Predicated region
    $region30: #{mlp1_forward.1} parent=1 // pred_check
      _
    $region31: #{mlp1_forward.1} parent=1 // pred_check_branch
      %444 = sbr.rel (0) target = $region33
    $region32: #{mlp1_forward.1} parent=1 // pred_region
      %s446 = ssub.s32 128, 128
      %447 = vsyncadd [#allocation3], %s446
      %s449 = sshll.u32 [#allocation2], 4
      %s450 = int_to_ptr.vmem [resolvable:$true] %s449
      %452 = dma.vmem_to_hbm [thread:$0]  %s450, 128, %s7, [#allocation3]
    $region33: #{mlp1_forward.1} parent=1 // pred_fallthru
      _
    // Predicated region
    $region34: #{mlp1_forward.1} parent=1 // pred_check
      _
    $region35: #{mlp1_forward.1} parent=1 // pred_check_branch
      %454 = sbr.rel (0) target = $region37
    $region36: #{mlp1_forward.1} parent=1 // pred_region
      %455 = dma.done [#allocation3], 128
    $region37: #{mlp1_forward.1} parent=1 // pred_fallthru
      _
    %456 = vsyncpa [#allocation3], 1

</llo_original>
